<compile_context>
chip_gen: v6e
topology: v6e:2x2x1
jax: 0.10.0
libtpu: 0.0.40
codegen_flags: <defaults>
</compile_context>

<pallas_src>
import jax
import jax.numpy as jnp
from jax.experimental import pallas as pl
from jax.experimental.pallas import tpu as pltpu


def _vmem_capacity_bytes():
    """Physical per-core VMEM; conservative 64 MiB fallback (v7x-safe)."""
    try:
        info = pltpu.get_tpu_info()
        cap = int(getattr(info, "vmem_capacity_bytes", 0) or 0)
        if cap >= (16 << 20):
            return cap
    except Exception:
        pass
    return 64 << 20


def _make_kernel(inv_t, batch, tile_rows, steps, need_mask):
    def kernel(zr_ref, zp_ref, zn_ref, out_ref, acc_ref):
        p = pl.program_id(0)
        i = pl.program_id(1)

        @pl.when(i == 0)
        def _init():
            acc_ref[...] = jnp.zeros_like(acc_ref)

        zr = zr_ref[...].astype(jnp.float32)
        zp = zp_ref[...].astype(jnp.float32)
        zn = zn_ref[...].astype(jnp.float32)

        # Five rowwise reductions -- no normalized (TB, D) intermediates.
        n2_r = jnp.sum(zr * zr, axis=1, keepdims=True)   # (TB, 1)
        n2_p = jnp.sum(zp * zp, axis=1, keepdims=True)
        n2_n = jnp.sum(zn * zn, axis=1, keepdims=True)
        d_rp = jnp.sum(zr * zp, axis=1, keepdims=True)
        d_rn = jnp.sum(zr * zn, axis=1, keepdims=True)

        # F.normalize clamps the norm at eps -> clamp the squared norm at
        # eps^2 and use rsqrt (EUP slot, no sqrt + divide on the VPU).
        eps2 = jnp.float32(1e-24)
        inv_r = jax.lax.rsqrt(jnp.maximum(n2_r, eps2))
        inv_p = jax.lax.rsqrt(jnp.maximum(n2_p, eps2))
        inv_n = jax.lax.rsqrt(jnp.maximum(n2_n, eps2))

        pos = d_rp * (inv_r * inv_p) * inv_t              # (TB, 1)
        neg = d_rn * (inv_r * inv_n) * inv_t              # (TB, 1)

        # cross_entropy([pos, neg], label=0) per row = softplus(neg - pos).
        d = neg - pos
        loss_i = jnp.maximum(d, 0.0) + jnp.log(1.0 + jnp.exp(-jnp.abs(d)))

        if need_mask:
            # Mask padded rows of partial tiles and duplicated (clamped)
            # tiles of the parallel split.  Uses the *unclamped* analytic
            # row offset of this grid point.
            row0 = (p * steps + i) * tile_rows
            row = jax.lax.broadcasted_iota(jnp.int32, loss_i.shape, 0) + row0
            loss_i = jnp.where(row < batch, loss_i, 0.0)

        acc_ref[...] += jnp.sum(loss_i, axis=0, keepdims=True)

        @pl.when(i == pl.num_programs(1) - 1)
        def _finalize():
            out_ref[...] = acc_ref[...]

    return kernel


def contrastive_loss(z_ref, z_pos, z_neg, temperature=0.1, block_rows=None):
    assert z_ref.shape == z_pos.shape == z_neg.shape
    assert z_ref.ndim == 2
    B, D = z_ref.shape
    itemsize = jnp.dtype(z_ref.dtype).itemsize

    # Generation-aware VMEM budgets.
    cap = _vmem_capacity_bytes()
    input_budget = cap // 2            # 64 MiB on v5e/v6e, 32 MiB on v7x
    vmem_limit = (cap * 3) // 4        # 96 MiB on v5e/v6e, 48 MiB on v7x

    # Dtype-native sublane multiple: 8 (f32) / 16 (bf16) / 32 (int8/fp8).
    sub = max(8, 32 // itemsize)

    # Bytes per tile row: 3 inputs x 2 pipeline buffers, plus the three f32
    # upcast temporaries when inputs are sub-32-bit, plus headroom for
    # elementwise product temporaries.
    cast_bytes = 3 * D * 4 if itemsize < 4 else 0
    bytes_per_row = 3 * 2 * D * itemsize + cast_bytes + 3 * D * 4
    tb_cap = max(sub, ((input_budget // bytes_per_row) // sub) * sub)

    if B <= sub:
        tb = B                                     # full-dim block, always legal
    else:
        tb = max(sub, min(tb_cap, (B // sub) * sub))
        if block_rows is not None:
            tb = min(tb, max(sub, (int(block_rows) // sub) * sub))

    nblocks = pl.cdiv(B, tb)
    # Leading "parallel" axis: splits the batch across the two TensorCores on
    # v7x; on single-TC chips it is just a serial outer loop (near-zero cost).
    n_par = 2 if nblocks >= 2 else 1
    steps = pl.cdiv(nblocks, n_par)
    need_mask = (n_par * steps * tb) != B

    if n_par * steps == nblocks:
        def blk(p, i):
            return p * steps + i
    else:
        # Grid overshoots the block count by < steps: clamp the duplicated
        # steps onto the last valid block (their rows are fully masked).
        def blk(p, i):
            return jnp.minimum(p * steps + i, nblocks - 1)

    in_spec = pl.BlockSpec((tb, D), lambda p, i: (blk(p, i), 0))
    out_spec = pl.BlockSpec((1, 1), lambda p, i: (p, 0))

    kernel = _make_kernel(1.0 / float(temperature), B, tb, steps, need_mask)

    cost = pl.CostEstimate(
        flops=10 * B * D,
        transcendentals=5 * B,
        bytes_accessed=3 * B * D * itemsize + n_par * 4,
    )

    partial = pl.pallas_call(
        kernel,
        out_shape=jax.ShapeDtypeStruct((n_par, 1), jnp.float32),
        grid=(n_par, steps),
        in_specs=[in_spec, in_spec, in_spec],
        out_specs=out_spec,
        scratch_shapes=[pltpu.VMEM((1, 1), jnp.float32)],
        compiler_params=pltpu.CompilerParams(
            # Batch chunks are independent (parallel); the trailing axis
            # carries the cross-tile loss accumulation (arbitrary).
            dimension_semantics=("parallel", "arbitrary"),
            vmem_limit_bytes=vmem_limit,
        ),
        cost_estimate=cost,
    )(z_ref, z_pos, z_neg)

    return jnp.sum(partial) * jnp.float32(1.0 / B)


def contrastive_loss_reference(z_ref, z_pos, z_neg, temperature=0.1):
    # Pure-JAX reference mirroring the PyTorch module.
    def norm(x):
        x = x.astype(jnp.float32)
        n = jnp.sqrt(jnp.sum(x * x, axis=1, keepdims=True))
        return x / jnp.maximum(n, 1e-12)

    zr, zp, zn = norm(z_ref), norm(z_pos), norm(z_neg)
    pos = jnp.sum(zr * zp, axis=1) / temperature
    neg = jnp.sum(zr * zn, axis=1) / temperature
    logits = jnp.stack([pos, neg], axis=1)
    return -jnp.mean(jax.nn.log_softmax(logits, axis=1)[:, 0])


if __name__ == "__main__":
    keys = jax.random.split(jax.random.PRNGKey(0), 9)

    # Case 1: small f32 batch, single tile, single chunk.
    B, D = 8, 32
    z_r = jax.random.normal(keys[0], (B, D), dtype=jnp.float32)
    z_p = jax.random.normal(keys[1], (B, D), dtype=jnp.float32)
    z_n = jax.random.normal(keys[2], (B, D), dtype=jnp.float32)
    loss = contrastive_loss(z_r, z_p, z_n, temperature=0.1)
    jax.block_until_ready(loss)
    ref = contrastive_loss_reference(z_r, z_p, z_n, temperature=0.1)
    assert jnp.allclose(loss, ref, atol=1e-4, rtol=1e-4), (loss, ref)

    # Case 2: f32, forced TB=8 -> 3 blocks over 2 parallel chunks
    # (exercises clamped duplicate step + partial-tile row masking).
    B2, D2 = 20, 32
    z_r2 = jax.random.normal(keys[3], (B2, D2), dtype=jnp.float32)
    z_p2 = jax.random.normal(keys[4], (B2, D2), dtype=jnp.float32)
    z_n2 = jax.random.normal(keys[5], (B2, D2), dtype=jnp.float32)
    loss2 = contrastive_loss(z_r2, z_p2, z_n2, temperature=0.1, block_rows=8)
    jax.block_until_ready(loss2)
    ref2 = contrastive_loss_reference(z_r2, z_p2, z_n2, temperature=0.1)
    assert jnp.allclose(loss2, ref2, atol=1e-4, rtol=1e-4), (loss2, ref2)

    # Case 3: bf16 inputs, lane-dense D=128, TB=16 (bf16 sublane multiple)
    # -> clean 2x2 grid, no masking, in-kernel bf16->f32 upcast.
    B3, D3 = 64, 128
    z_r3 = jax.random.normal(keys[6], (B3, D3), dtype=jnp.float32).astype(jnp.bfloat16)
    z_p3 = jax.random.normal(keys[7], (B3, D3), dtype=jnp.float32).astype(jnp.bfloat16)
    z_n3 = jax.random.normal(keys[8], (B3, D3), dtype=jnp.float32).astype(jnp.bfloat16)
    loss3 = contrastive_loss(z_r3, z_p3, z_n3, temperature=0.1, block_rows=16)
    jax.block_until_ready(loss3)
    ref3 = contrastive_loss_reference(z_r3, z_p3, z_n3, temperature=0.1)
    assert jnp.allclose(loss3, ref3, atol=1e-4, rtol=1e-4), (loss3, ref3)

    print("KERNEL_OK")
</pallas_src>

<mosaic_0001>
module attributes {stable_mosaic.version = 11 : i64} {
  func.func @kernel(%arg0: i32, %arg1: i32, %arg2: memref<8x32xf32, #tpu.memory_space<vmem>>, %arg3: memref<8x32xf32, #tpu.memory_space<vmem>>, %arg4: memref<8x32xf32, #tpu.memory_space<vmem>>, %arg5: memref<1x1xf32, #tpu.memory_space<vmem>>, %arg6: memref<1x1xf32, #tpu.memory_space<vmem>>) attributes {dimension_semantics = [#tpu.dimension_semantics<parallel>, #tpu.dimension_semantics<arbitrary>], iteration_bounds = array<i64: 1, 1>, scalar_prefetch = 0 : i64, scratch_operands = 1 : i64, tpu.core_type = #tpu.core_type<tc>, window_params = [{transform_indices = @transform_0, window_bounds = array<i64: 8, 32>}, {transform_indices = @transform_1, window_bounds = array<i64: 8, 32>}, {transform_indices = @transform_2, window_bounds = array<i64: 8, 32>}, {transform_indices = @transform_3, window_bounds = array<i64: 1, 1>}]} {
    %c0_i32 = arith.constant 0 : i32
    %0 = arith.cmpi eq, %arg1, %c0_i32 : i32
    %1 = arith.extui %0 : i1 to i32
    %c0_i32_0 = arith.constant 0 : i32
    %2 = arith.cmpi ne, %1, %c0_i32_0 : i32
    scf.if %2 {
      %cst_25 = arith.constant 0.000000e+00 : f32
      %57 = vector.broadcast %cst_25 : f32 to vector<1x1xf32>
      %c0_26 = arith.constant 0 : index
      %c0_27 = arith.constant 0 : index
      %58 = vector.load %arg6[%c0_26, %c0_27] : memref<1x1xf32, #tpu.memory_space<vmem>>, vector<1x1xf32>
      tpu.vector_store %arg6[%c0_26, %c0_27], %57 {strides = array<i32>} : memref<1x1xf32, #tpu.memory_space<vmem>>, vector<1x1xf32>,
    } else {
    }
    %c0 = arith.constant 0 : index
    %c0_1 = arith.constant 0 : index
    %3 = vector.load %arg2[%c0, %c0_1] : memref<8x32xf32, #tpu.memory_space<vmem>>, vector<8x32xf32>
    %c0_2 = arith.constant 0 : index
    %c0_3 = arith.constant 0 : index
    %4 = vector.load %arg3[%c0_2, %c0_3] : memref<8x32xf32, #tpu.memory_space<vmem>>, vector<8x32xf32>
    %c0_4 = arith.constant 0 : index
    %c0_5 = arith.constant 0 : index
    %5 = vector.load %arg4[%c0_4, %c0_5] : memref<8x32xf32, #tpu.memory_space<vmem>>, vector<8x32xf32>
    %6 = arith.mulf %3, %3 : vector<8x32xf32>
    %cst = arith.constant dense<0.000000e+00> : vector<8xf32>
    %7 = vector.multi_reduction <add>, %6, %cst [1] : vector<8x32xf32> to vector<8xf32>
    %8 = vector.shape_cast %7 : vector<8xf32> to vector<8x1xf32>
    %9 = arith.mulf %4, %4 : vector<8x32xf32>
    %cst_6 = arith.constant dense<0.000000e+00> : vector<8xf32>
    %10 = vector.multi_reduction <add>, %9, %cst_6 [1] : vector<8x32xf32> to vector<8xf32>
    %11 = vector.shape_cast %10 : vector<8xf32> to vector<8x1xf32>
    %12 = arith.mulf %5, %5 : vector<8x32xf32>
    %cst_7 = arith.constant dense<0.000000e+00> : vector<8xf32>
    %13 = vector.multi_reduction <add>, %12, %cst_7 [1] : vector<8x32xf32> to vector<8xf32>
    %14 = vector.shape_cast %13 : vector<8xf32> to vector<8x1xf32>
    %15 = arith.mulf %3, %4 : vector<8x32xf32>
    %cst_8 = arith.constant dense<0.000000e+00> : vector<8xf32>
    %16 = vector.multi_reduction <add>, %15, %cst_8 [1] : vector<8x32xf32> to vector<8xf32>
    %17 = vector.shape_cast %16 : vector<8xf32> to vector<8x1xf32>
    %18 = arith.mulf %3, %5 : vector<8x32xf32>
    %cst_9 = arith.constant dense<0.000000e+00> : vector<8xf32>
    %19 = vector.multi_reduction <add>, %18, %cst_9 [1] : vector<8x32xf32> to vector<8xf32>
    %20 = vector.shape_cast %19 : vector<8xf32> to vector<8x1xf32>
    %cst_10 = arith.constant 1.000000e-24 : f32
    %21 = vector.broadcast %cst_10 : f32 to vector<8x1xf32>
    %22 = arith.maximumf %8, %21 : vector<8x1xf32>
    %23 = math.rsqrt %22 : vector<8x1xf32>
    %cst_11 = arith.constant 1.000000e-24 : f32
    %24 = vector.broadcast %cst_11 : f32 to vector<8x1xf32>
    %25 = arith.maximumf %11, %24 : vector<8x1xf32>
    %26 = math.rsqrt %25 : vector<8x1xf32>
    %cst_12 = arith.constant 1.000000e-24 : f32
    %27 = vector.broadcast %cst_12 : f32 to vector<8x1xf32>
    %28 = arith.maximumf %14, %27 : vector<8x1xf32>
    %29 = math.rsqrt %28 : vector<8x1xf32>
    %30 = arith.mulf %23, %26 : vector<8x1xf32>
    %31 = arith.mulf %17, %30 : vector<8x1xf32>
    %cst_13 = arith.constant 1.000000e+01 : f32
    %32 = vector.broadcast %cst_13 : f32 to vector<8x1xf32>
    %33 = arith.mulf %31, %32 : vector<8x1xf32>
    %34 = arith.mulf %23, %29 : vector<8x1xf32>
    %35 = arith.mulf %20, %34 : vector<8x1xf32>
    %cst_14 = arith.constant 1.000000e+01 : f32
    %36 = vector.broadcast %cst_14 : f32 to vector<8x1xf32>
    %37 = arith.mulf %35, %36 : vector<8x1xf32>
    %38 = arith.subf %37, %33 : vector<8x1xf32>
    %cst_15 = arith.constant 0.000000e+00 : f32
    %39 = vector.broadcast %cst_15 : f32 to vector<8x1xf32>
    %40 = arith.maximumf %38, %39 : vector<8x1xf32>
    %41 = math.absf %38 : vector<8x1xf32>
    %cst_16 = arith.constant 0.000000e+00 : f32
    %42 = vector.broadcast %cst_16 : f32 to vector<8x1xf32>
    %43 = arith.subf %42, %41 : vector<8x1xf32>
    %44 = math.exp %43 : vector<8x1xf32>
    %cst_17 = arith.constant 1.000000e+00 : f32
    %45 = vector.broadcast %cst_17 : f32 to vector<8x1xf32>
    %46 = arith.addf %45, %44 : vector<8x1xf32>
    %47 = math.log %46 : vector<8x1xf32>
    %48 = arith.addf %40, %47 : vector<8x1xf32>
    %c0_18 = arith.constant 0 : index
    %c0_19 = arith.constant 0 : index
    %49 = vector.load %arg6[%c0_18, %c0_19] : memref<1x1xf32, #tpu.memory_space<vmem>>, vector<1x1xf32>
    %cst_20 = arith.constant dense<0.000000e+00> : vector<1xf32>
    %50 = vector.multi_reduction <add>, %48, %cst_20 [0] : vector<8x1xf32> to vector<1xf32>
    %51 = vector.shape_cast %50 : vector<1xf32> to vector<1x1xf32>
    %52 = arith.addf %49, %51 : vector<1x1xf32>
    %c0_21 = arith.constant 0 : index
    %c0_22 = arith.constant 0 : index
    %53 = vector.load %arg6[%c0_21, %c0_22] : memref<1x1xf32, #tpu.memory_space<vmem>>, vector<1x1xf32>
    tpu.vector_store %arg6[%c0_21, %c0_22], %52 {strides = array<i32>} : memref<1x1xf32, #tpu.memory_space<vmem>>, vector<1x1xf32>,
    %c0_i32_23 = arith.constant 0 : i32
    %54 = arith.cmpi eq, %arg1, %c0_i32_23 : i32
    %55 = arith.extui %54 : i1 to i32
    %c0_i32_24 = arith.constant 0 : i32
    %56 = arith.cmpi ne, %55, %c0_i32_24 : i32
    scf.if %56 {
      %c0_25 = arith.constant 0 : index
      %c0_26 = arith.constant 0 : index
      %57 = vector.load %arg6[%c0_25, %c0_26] : memref<1x1xf32, #tpu.memory_space<vmem>>, vector<1x1xf32>
      %c0_27 = arith.constant 0 : index
      %c0_28 = arith.constant 0 : index
      %58 = vector.load %arg5[%c0_27, %c0_28] : memref<1x1xf32, #tpu.memory_space<vmem>>, vector<1x1xf32>
      tpu.vector_store %arg5[%c0_27, %c0_28], %57 {strides = array<i32>} : memref<1x1xf32, #tpu.memory_space<vmem>>, vector<1x1xf32>,
    } else {
    }
    return
  }
  func.func @transform_0(%arg0: i32, %arg1: i32) -> (i32, i32) {
    %c1_i32 = arith.constant 1 : i32
    %0 = arith.muli %arg0, %c1_i32 : i32
    %1 = arith.addi %0, %arg1 : i32
    %c0_i32 = arith.constant 0 : i32
    %c0_i32_0 = arith.constant 0 : i32
    return %1, %c0_i32 : i32, i32
  }
  func.func @transform_1(%arg0: i32, %arg1: i32) -> (i32, i32) {
    %c1_i32 = arith.constant 1 : i32
    %0 = arith.muli %arg0, %c1_i32 : i32
    %1 = arith.addi %0, %arg1 : i32
    %c0_i32 = arith.constant 0 : i32
    %c0_i32_0 = arith.constant 0 : i32
    return %1, %c0_i32 : i32, i32
  }
  func.func @transform_2(%arg0: i32, %arg1: i32) -> (i32, i32) {
    %c1_i32 = arith.constant 1 : i32
    %0 = arith.muli %arg0, %c1_i32 : i32
    %1 = arith.addi %0, %arg1 : i32
    %c0_i32 = arith.constant 0 : i32
    %c0_i32_0 = arith.constant 0 : i32
    return %1, %c0_i32 : i32, i32
  }
  func.func @transform_3(%arg0: i32, %arg1: i32) -> (i32, i32) {
    %c0_i32 = arith.constant 0 : i32
    %c0_i32_0 = arith.constant 0 : i32
    return %arg0, %c0_i32 : i32, i32
  }
}

</mosaic_0001>

<llo_original>
// kernel: tpu_custom_call.1
$region0: #{tpu_custom_call.1}
  #allocation0 [shape = 'u32[]', space=smem, size = 0x4, offset = 0x4, fixed_abs, tag = 'smem constant byte address 0x4 - core index']
  #allocation1 [shape = 'u32[144,128]{1,0:T(1,128)}', space=vmem, size = 0x12000, scoped, tag = 'internal scratch']
  #allocation2 [shape = 'f32[1,1]{1,0:T(1,128)}', space=vmem, size = 0x200, scoped, tag = 'scratch operand']
  %s0 = inlined_call_operand.hbm [shape: f32[8,32], index: 0, kind: input, shape index: {}]
  %s1 = inlined_call_operand.hbm [shape: f32[8,32], index: 1, kind: input, shape index: {}]
  %s2 = inlined_call_operand.hbm [shape: f32[8,32], index: 2, kind: input, shape index: {}]
  %s3 = inlined_call_operand.hbm [shape: f32[1,1], index: 3, kind: output, shape index: {}]
  %s4 = sld [smem:[#allocation0]]
  $region42: #{tpu_custom_call.1} parent=0
    _
  %s6 = ssub.s32 1, %s4
  %s7 = scalar_select 0, %s6, %s4
  $region1: #{tpu_custom_call.1} parent=0
    #allocation3 [shape = 'u8[4096]{0}', space=vmem, size = 0x1000, scoped, tag = 'input window, operand 0, single buffered']
    #allocation4 [shape = 's32[1]{0}', space=sflag, size = 0x4, scoped, tag = 'scoped memory for tpu_custom_call.1']
    #allocation5 [shape = 's32[1]{0}', space=sflag, size = 0x4, scoped, tag = 'scoped memory for tpu_custom_call.1']
    #allocation6 [shape = 'u8[4096]{0}', space=vmem, size = 0x1000, scoped, tag = 'input window, operand 1, single buffered']
    #allocation7 [shape = 's32[1]{0}', space=sflag, size = 0x4, scoped, tag = 'scoped memory for tpu_custom_call.1']
    #allocation8 [shape = 'u8[4096]{0}', space=vmem, size = 0x1000, scoped, tag = 'input window, operand 2, single buffered']
    #allocation9 [shape = 'u8[512]{0}', space=vmem, size = 0x400, scoped, tag = 'output window, operand 0, single buffered']
    %8 = vsyncpa [#allocation4], 0
    %9 = vsyncpa [#allocation7], 0
    %10 = vsyncpa [#allocation5], 0
    // Predicated region
    $region2: #{tpu_custom_call.1} parent=1 // pred_check
      _
    $region3: #{tpu_custom_call.1} parent=1 // pred_check_branch
      %12 = sbr.rel (0) target = $region5
    $region4: #{tpu_custom_call.1} parent=1 // pred_region
      %s13 = sadd.s32 0, 0
      %s15 = ssub.s32 128, 128
      %16 = vsyncadd [#allocation4], %s15
      %s17 = smul.addr %s13, 128
      %s18 = scalar_lea.hbm %s0, %s17
      %s20 = sshll.u32 [#allocation3], 4
      %s21 = int_to_ptr.vmem [resolvable:$true] %s20
      %23 = dma.hbm_to_vmem [thread:$0]  %s18, 128, %s21, [#allocation4]
    $region5: #{tpu_custom_call.1} parent=1 // pred_fallthru
      _
    // Predicated region
    $region6: #{tpu_custom_call.1} parent=1 // pred_check
      _
    $region7: #{tpu_custom_call.1} parent=1 // pred_check_branch
      %25 = sbr.rel (0) target = $region9
    $region8: #{tpu_custom_call.1} parent=1 // pred_region
      %s26 = sadd.s32 0, 0
      %s28 = ssub.s32 128, 128
      %29 = vsyncadd [#allocation7], %s28
      %s30 = smul.addr %s26, 128
      %s31 = scalar_lea.hbm %s1, %s30
      %s33 = sshll.u32 [#allocation6], 4
      %s34 = int_to_ptr.vmem [resolvable:$true] %s33
      %36 = dma.hbm_to_vmem [thread:$0]  %s31, 128, %s34, [#allocation7]
    $region9: #{tpu_custom_call.1} parent=1 // pred_fallthru
      _
    // Predicated region
    $region10: #{tpu_custom_call.1} parent=1 // pred_check
      _
    $region11: #{tpu_custom_call.1} parent=1 // pred_check_branch
      %38 = sbr.rel (0) target = $region13
    $region12: #{tpu_custom_call.1} parent=1 // pred_region
      %s39 = sadd.s32 0, 0
      %s41 = ssub.s32 128, 128
      %42 = vsyncadd [#allocation7], %s41
      %s43 = smul.addr %s39, 128
      %s44 = scalar_lea.hbm %s2, %s43
      %s46 = sshll.u32 [#allocation8], 4
      %s47 = int_to_ptr.vmem [resolvable:$true] %s46
      %49 = dma.hbm_to_vmem [thread:$0]  %s44, 128, %s47, [#allocation7]
    $region13: #{tpu_custom_call.1} parent=1 // pred_fallthru
      _
    // Predicated region
    $region14: #{tpu_custom_call.1} parent=1 // pred_check
      _
    $region15: #{tpu_custom_call.1} parent=1 // pred_check_branch
      %51 = sbr.rel (0) target = $region17
    $region16: #{tpu_custom_call.1} parent=1 // pred_region
      %52 = dma.done [#allocation4], 128
    $region17: #{tpu_custom_call.1} parent=1 // pred_fallthru
      _
    // Predicated region
    $region18: #{tpu_custom_call.1} parent=1 // pred_check
      _
    $region19: #{tpu_custom_call.1} parent=1 // pred_check_branch
      %54 = sbr.rel (0) target = $region21
    $region20: #{tpu_custom_call.1} parent=1 // pred_region
      %55 = dma.done [#allocation7], 128
    $region21: #{tpu_custom_call.1} parent=1 // pred_fallthru
      _
    // Predicated region
    $region22: #{tpu_custom_call.1} parent=1 // pred_check
      _
    $region23: #{tpu_custom_call.1} parent=1 // pred_check_branch
      %57 = sbr.rel (0) target = $region25
    $region24: #{tpu_custom_call.1} parent=1 // pred_region
      %58 = dma.done [#allocation7], 128
    $region25: #{tpu_custom_call.1} parent=1 // pred_fallthru
      _
    %s59 = sadd.s32 0, 0
    %s60 = sadd.s32 0, 0
    %s61 = sadd.s32 0, 0
    %p62 = scmp.eq.s32.totalorder 0, 0
    // Predicated region
    $region26: #{tpu_custom_call.1} parent=1 // pred_check
      %p63 = pneg %p62
    $region27: #{tpu_custom_call.1} parent=1 // pred_check_branch
      %65 = sbr.rel (%p63) target = $region29
    $region28: #{tpu_custom_call.1} parent=1 // pred_region
      %vm66 = vcmask 0
      %67 = vst.msk [vmem:[#allocation2] sm:$0x1] %vm66, 0.0
    $region29: #{tpu_custom_call.1} parent=1 // pred_fallthru
      _
    %v68 = vld [vmem:[#allocation3] sm:$0xff]
    %v69 = vld [vmem:[#allocation6] sm:$0xff]
    %v70 = vld [vmem:[#allocation8] sm:$0xff]
    %v71 = vmul.f32 %v68, %v68
    %vm72 = vcmask 261120
    %v73 = vsel %vm72, %v71, 0.0
    %74 = vadd.xlane.f32.xlu0 %v73
    %v75 = vpop.xlane.xlu0 %74
    %v76 = vmul.f32 %v69, %v69
    %v77 = vsel %vm72, %v76, 0.0
    %78 = vadd.xlane.f32.xlu0 %v77
    %v79 = vpop.xlane.xlu0 %78
    %v80 = vmul.f32 %v70, %v70
    %v81 = vsel %vm72, %v80, 0.0
    %82 = vadd.xlane.f32.xlu0 %v81
    %v83 = vpop.xlane.xlu0 %82
    %v84 = vmul.f32 %v68, %v69
    %v85 = vsel %vm72, %v84, 0.0
    %86 = vadd.xlane.f32.xlu0 %v85
    %v87 = vpop.xlane.xlu0 %86
    %v88 = vmul.f32 %v68, %v70
    %v89 = vsel %vm72, %v88, 0.0
    %90 = vadd.xlane.f32.xlu0 %v89
    %v91 = vpop.xlane.xlu0 %90
    %v92 = vmax.f32 %v75, 1e-24
    %v93 = vrsqrt.pop %v92
    %v94 = vmax.f32 %v79, 1e-24
    %v95 = vrsqrt.pop %v94
    %v96 = vmax.f32 %v83, 1e-24
    %v97 = vrsqrt.pop %v96
    %v98 = vmul.f32 %v93, %v95
    %v99 = vmul.f32 %v87, %v98
    %v100 = vmul.f32 %v99, 10.0
    %v101 = vmul.f32 %v93, %v97
    %v102 = vmul.f32 %v91, %v101
    %v103 = vmul.f32 %v102, 10.0
    %v104 = vsub.f32 %v103, %v100
    %v105 = vmax.f32 %v104, 0.0
    %v106 = vand.u32 2147483647, %v104
    %v107 = vsub.f32 0.0, %v106
    %v108 = vmul.f32 %v107, 1.442695
    %v109 = vpow.pop %v108
    %v110 = vadd.f32 %v109, 1.0
    %v111 = vlog2.pop %v110
    %v112 = vmul.f32 %v111, 0.6931472
    %v113 = vadd.f32 %v105, %v112
    %v114 = vld [vmem:[#allocation2] sm:$0x1]
    %v115 = vrot.slane %v113, 4
    %v116 = vadd.f32 %v113, %v115
    %v117 = vrot.slane %v116, 2
    %v118 = vadd.f32 %v116, %v117
    %v119 = vrot.slane %v118, 1
    %v120 = vadd.f32 %v118, %v119
    %v121 = vadd.f32 %v114, %v120
    %vm122 = vcmask 0
    %123 = vst.msk [vmem:[#allocation2] sm:$0x1] %vm122, %v121
    // Predicated region
    $region30: #{tpu_custom_call.1} parent=1 // pred_check
      %p124 = pneg %p62
    $region31: #{tpu_custom_call.1} parent=1 // pred_check_branch
      %126 = sbr.rel (%p124) target = $region33
    $region32: #{tpu_custom_call.1} parent=1 // pred_region
      %v127 = vld [vmem:[#allocation2] sm:$0x1]
      %128 = vst.msk [vmem:[#allocation9] sm:$0x1] %vm122, %v127
    $region33: #{tpu_custom_call.1} parent=1 // pred_fallthru
      _
    // Predicated region
    $region34: #{tpu_custom_call.1} parent=1 // pred_check
      _
    $region35: #{tpu_custom_call.1} parent=1 // pred_check_branch
      %130 = sbr.rel (0) target = $region37
    $region36: #{tpu_custom_call.1} parent=1 // pred_region
      %s132 = ssub.s32 16, 16
      %133 = vsyncadd [#allocation5], %s132
      %s135 = sshll.u32 [#allocation9], 4
      %s136 = int_to_ptr.vmem [resolvable:$true] %s135
      %138 = dma.vmem_to_hbm [thread:$0]  %s136, 16, %s3, [#allocation5]
    $region37: #{tpu_custom_call.1} parent=1 // pred_fallthru
      _
    // Predicated region
    $region38: #{tpu_custom_call.1} parent=1 // pred_check
      _
    $region39: #{tpu_custom_call.1} parent=1 // pred_check_branch
      %140 = sbr.rel (0) target = $region41
    $region40: #{tpu_custom_call.1} parent=1 // pred_region
      %141 = dma.done [#allocation5], 16
    $region41: #{tpu_custom_call.1} parent=1 // pred_fallthru
      _
    %142 = vsyncpa [#allocation4], 1
    %143 = vsyncpa [#allocation7], 1
    %144 = vsyncpa [#allocation5], 1

</llo_original>
